<compile_context>
chip_gen: v5e
topology: v5e:2x2
jax: 0.10.0
libtpu: 0.0.40
codegen_flags: <defaults>
</compile_context>

<pallas_src>
import jax
import jax.numpy as jnp
from jax.experimental import pallas as pl
from jax.experimental.pallas import tpu as pltpu

GAMMA = 2.0      # FocalLoss.gamma (== 2.0 -> explicit squares in-kernel)
ALPHA = 0.25     # FocalLoss.alpha
SMOOTH = 1.0     # DiceLoss.smooth
WEIGHT = 20.0    # FocalDiceloss.weight
EPS = 1e-12

_LANES = 128
_ACC_SUBLANES = 8
_MAX_BLOCK_ROWS = 4096      # 4096*128*4B = 2 MiB per f32 input block
_PAD_LOGIT = -100.0         # sigmoid(-100) ~ 0 -> sentinel elements contribute ~0
_VMEM_LIMIT_BYTES = 32 * 1024 * 1024


def _cdiv(a, b):
    return -(-a // b)


def _round_up(x, m):
    return ((x + m - 1) // m) * m


def _row_granularity(dtype):
    # Sublane packing granularity of the second-to-last block dim per dtype width.
    itemsize = jnp.dtype(dtype).itemsize
    return {1: 32, 2: 16, 4: 8}.get(itemsize, 8)


def _make_kernel(block_rows, blocks_per_split, padded_rows,
                 needs_edge_mask, assume_binary_mask):
    """Kernel accumulating per-lane partials of
       [dice intersection, sum(p), sum(mask), focal numerator]."""

    def kernel(pred_ref, mask_ref, out_ref):
        c = pl.program_id(0)   # split across TensorCores ("parallel")
        i = pl.program_id(1)   # reduction over row-blocks ("arbitrary")

        @pl.when(i == 0)
        def _init():
            out_ref[...] = jnp.zeros_like(out_ref)

        x = pred_ref[...].astype(jnp.float32)
        m = mask_ref[...].astype(jnp.float32)

        if needs_edge_mask:
            # Rows past the end of the input (ragged last block and/or the
            # clamped duplicate block of an odd split) are neutralized BEFORE
            # any arithmetic so garbage (possibly NaN/Inf) cannot propagate.
            limit = padded_rows - (c * blocks_per_split + i) * block_rows
            row = jax.lax.broadcasted_iota(jnp.int32, x.shape, 0)
            valid = row < limit
            x = jnp.where(valid, x, _PAD_LOGIT)
            m = jnp.where(valid, m, 0.0)

        # sigmoid / log-sigmoid with only 2 heavy EUP transcendentals (exp, log);
        # the divide uses the cheap approximate vrcp + one Newton step (VALU).
        e = jnp.exp(-jnp.abs(x))
        ls = jnp.log(1.0 + e)
        d = 1.0 + e
        r = pl.reciprocal(d, approx=True)
        r = r * (2.0 - d * r)                       # Newton step -> ~f32 accuracy
        p = jnp.where(x >= 0.0, 1.0, e) * r         # == sigmoid(x)
        log_p = -(jnp.maximum(-x, 0.0) + ls)        # == log(sigmoid(x))
        log_1mp = -(jnp.maximum(x, 0.0) + ls)       # == log(1 - sigmoid(x))

        one_minus_p = 1.0 - p
        w_pos = one_minus_p * one_minus_p           # gamma == 2 -> plain VPU squares
        w_neg = p * p

        if assume_binary_mask:
            # Mask guaranteed 0/1: drop the m* / (1-m)* blend (VALU relief).
            focal_elem = jnp.where(m != 0.0,
                                   (-ALPHA) * (w_pos * log_p),
                                   (ALPHA - 1.0) * (w_neg * log_1mp))
        else:
            focal_elem = (-ALPHA) * (m * w_pos * log_p) \
                         - (1.0 - ALPHA) * ((1.0 - m) * w_neg * log_1mp)

        def fold(v):
            # (block_rows, 128) -> (block_rows/8, 8, 128), sum over the leading
            # axis = pure VALU vreg adds; no XLU in the hot loop.
            return jnp.sum(v.reshape(-1, _ACC_SUBLANES, v.shape[-1]), axis=0)

        out_ref[0, 0] += fold(p * m)          # dice intersection
        out_ref[0, 1] += fold(p)              # sum(sigmoid(pred))
        out_ref[0, 2] += fold(m)              # sum(mask)
        out_ref[0, 3] += fold(focal_elem)     # focal numerator

    return kernel


def focal_dice_loss(pred, mask, *, weight=WEIGHT, iou_scale=1.0, smooth=SMOOTH,
                    assume_binary_mask=False, max_block_rows=_MAX_BLOCK_ROWS):
    """Pallas implementation of FocalDiceloss.forward (iou_scale unused, as in PyTorch)."""
    assert pred.shape == mask.shape, "pred and mask should have the same shape."
    total = int(pred.size)

    gran = max(_row_granularity(pred.dtype), _row_granularity(mask.dtype))
    n_rows = _cdiv(total, _LANES)
    block_rows = min(_round_up(max_block_rows, gran), _round_up(n_rows, gran))
    padded_rows = max(n_rows, block_rows)
    padded_total = padded_rows * _LANES

    pf = pred.reshape(-1)
    mf = mask.reshape(-1)
    if padded_total != total:
        # Rare path (numel not lane-aligned, or tiny input): small sentinel pad
        # to the next lane/sublane-aligned length; sentinel (-100 logit, 0 mask)
        # contributes ~0 to every sum.
        pf = jnp.pad(pf, (0, padded_total - total), constant_values=_PAD_LOGIT)
        mf = jnp.pad(mf, (0, padded_total - total), constant_values=0)
    pf = pf.reshape(padded_rows, _LANES)
    mf = mf.reshape(padded_rows, _LANES)

    blocks_total = _cdiv(padded_rows, block_rows)
    # 2-way split across v7x TensorCores; on single-TC chips it is just a second
    # (cheap) sequential group. Skipped when there is only one block of work.
    num_splits = 2 if blocks_total >= 2 else 1
    blocks_per_split = _cdiv(blocks_total, num_splits)
    covered_rows = num_splits * blocks_per_split * block_rows
    needs_edge_mask = covered_rows > padded_rows
    last_block = blocks_total - 1

    def in_index_map(c, i):
        # Clamp so the DMA start stays in bounds even for the "extra" block a
        # split may get when blocks_total is odd; the in-kernel validity mask
        # (computed from the *logical* indices) zeroes its contribution.
        return (jnp.minimum(c * blocks_per_split + i, last_block), 0)

    kernel = _make_kernel(block_rows, blocks_per_split, padded_rows,
                          needs_edge_mask, assume_binary_mask)

    out_elems = num_splits * 4 * _ACC_SUBLANES * _LANES
    cost = pl.CostEstimate(
        flops=30 * padded_total,
        transcendentals=2 * padded_total,
        bytes_accessed=padded_total * (jnp.dtype(pred.dtype).itemsize
                                       + jnp.dtype(mask.dtype).itemsize)
                       + out_elems * 4,
    )

    partials = pl.pallas_call(
        kernel,
        out_shape=jax.ShapeDtypeStruct(
            (num_splits, 4, _ACC_SUBLANES, _LANES), jnp.float32),
        grid_spec=pltpu.PrefetchScalarGridSpec(
            num_scalar_prefetch=0,
            grid=(num_splits, blocks_per_split),
            in_specs=[
                pl.BlockSpec((block_rows, _LANES), in_index_map),
                pl.BlockSpec((block_rows, _LANES), in_index_map),
            ],
            # Output block indexed only by the split -> resident VMEM accumulator
            # across the "arbitrary" reduction axis (init / writeback handled by
            # pl.when + pipeline), distinct block per TensorCore (no races).
            out_specs=pl.BlockSpec((1, 4, _ACC_SUBLANES, _LANES),
                                   lambda c, i: (c, 0, 0, 0)),
        ),
        compiler_params=pltpu.CompilerParams(
            dimension_semantics=("parallel", "arbitrary"),
            vmem_limit_bytes=_VMEM_LIMIT_BYTES,
        ),
        cost_estimate=cost,
    )(pf, mf)

    sums = jnp.sum(partials, axis=(0, 2, 3))   # tiny final reduce in plain JAX
    intersection, sum_p, sum_m, focal_sum = sums[0], sums[1], sums[2], sums[3]

    # FocalLoss normalization (num_pos + num_neg == numel, kept as PyTorch writes it).
    num_pos = sum_m
    num_neg = jnp.float32(total) - num_pos
    focal_loss = focal_sum / (num_pos + num_neg + EPS)

    # DiceLoss.
    dice = (2.0 * intersection + smooth) / (sum_p + sum_m + smooth)
    dice_loss = 1.0 - dice

    return weight * focal_loss + dice_loss


def _focal_dice_loss_ref(pred, mask, *, weight=WEIGHT, smooth=SMOOTH):
    """Pure-JAX reference matching the PyTorch module."""
    p = jax.nn.sigmoid(pred.astype(jnp.float32))
    m = mask.astype(jnp.float32)

    num_pos = jnp.sum(m)
    num_neg = m.size - num_pos
    w_pos = (1.0 - p) ** GAMMA
    w_neg = p ** GAMMA
    loss_pos = -ALPHA * m * w_pos * jnp.log(p + EPS)
    loss_neg = -(1.0 - ALPHA) * (1.0 - m) * w_neg * jnp.log(1.0 - p + EPS)
    focal = (jnp.sum(loss_pos) + jnp.sum(loss_neg)) / (num_pos + num_neg + EPS)

    inter = jnp.sum(p * m)
    union = jnp.sum(p) + jnp.sum(m)
    dice = 1.0 - (2.0 * inter + smooth) / (union + smooth)

    return weight * focal + dice


if __name__ == "__main__":
    key = jax.random.PRNGKey(0)
    kp, km, kp2, km2, kp3, km3 = jax.random.split(key, 6)

    # 1) Module's NCHW contract, lane-aligned case (no pad, single block).
    B, C, H, W = 2, 4, 16, 16
    pred = jax.random.normal(kp, (B, C, H, W), dtype=jnp.float32)
    mask = (jax.random.uniform(km, (B, C, H, W)) > 0.5).astype(jnp.float32)
    loss = jax.block_until_ready(focal_dice_loss(pred, mask))
    ref = _focal_dice_loss_ref(pred, mask)
    assert jnp.allclose(loss, ref, rtol=1e-4, atol=1e-5), (loss, ref)

    # 2) Same data, binary-mask fast path.
    loss_b = jax.block_until_ready(focal_dice_loss(pred, mask, assume_binary_mask=True))
    assert jnp.allclose(loss_b, ref, rtol=1e-4, atol=1e-5), (loss_b, ref)

    # 3) Same data, narrow mask dtype (bf16) consumed natively by the kernel.
    loss_n = jax.block_until_ready(focal_dice_loss(pred, mask.astype(jnp.bfloat16)))
    assert jnp.allclose(loss_n, ref, rtol=1e-4, atol=1e-5), (loss_n, ref)

    # 4) Non-lane-aligned numel -> sentinel-pad path.
    pred2 = jax.random.normal(kp2, (2, 1, 17, 13), dtype=jnp.float32)
    mask2 = (jax.random.uniform(km2, (2, 1, 17, 13)) > 0.5).astype(jnp.float32)
    loss2 = jax.block_until_ready(focal_dice_loss(pred2, mask2))
    ref2 = _focal_dice_loss_ref(pred2, mask2)
    assert jnp.allclose(loss2, ref2, rtol=1e-4, atol=1e-5), (loss2, ref2)

    # 5) Multi-block + 2-way split + ragged last block + clamped extra block,
    #    exercised at small size by shrinking max_block_rows.
    pred3 = jax.random.normal(kp3, (2, 4, 20, 16), dtype=jnp.float32)
    mask3 = (jax.random.uniform(km3, (2, 4, 20, 16)) > 0.5).astype(jnp.float32)
    loss3 = jax.block_until_ready(focal_dice_loss(pred3, mask3, max_block_rows=8))
    ref3 = _focal_dice_loss_ref(pred3, mask3)
    assert jnp.allclose(loss3, ref3, rtol=1e-4, atol=1e-5), (loss3, ref3)

    print("KERNEL_OK")
</pallas_src>

<mosaic_0001>
module attributes {stable_mosaic.version = 11 : i64} {
  func.func @kernel(%arg0: i32, %arg1: i32, %arg2: memref<16x128xf32, #tpu.memory_space<vmem>>, %arg3: memref<16x128xf32, #tpu.memory_space<vmem>>, %arg4: memref<1x4x8x128xf32, #tpu.memory_space<vmem>>) attributes {dimension_semantics = [#tpu.dimension_semantics<parallel>, #tpu.dimension_semantics<arbitrary>], iteration_bounds = array<i64: 1, 1>, scalar_prefetch = 0 : i64, scratch_operands = 0 : i64, tpu.core_type = #tpu.core_type<tc>, window_params = [{transform_indices = @transform_0, window_bounds = array<i64: 16, 128>}, {transform_indices = @transform_1, window_bounds = array<i64: 16, 128>}, {transform_indices = @transform_2, window_bounds = array<i64: 1, 4, 8, 128>}]} {
    %c0_i32 = arith.constant 0 : i32
    %0 = arith.cmpi eq, %arg1, %c0_i32 : i32
    %1 = arith.extui %0 : i1 to i32
    %c0_i32_0 = arith.constant 0 : i32
    %2 = arith.cmpi ne, %1, %c0_i32_0 : i32
    scf.if %2 {
      %cst_51 = arith.constant 0.000000e+00 : f32
      %84 = vector.broadcast %cst_51 : f32 to vector<1x4x8x128xf32>
      %c0_52 = arith.constant 0 : index
      %c0_53 = arith.constant 0 : index
      %c0_54 = arith.constant 0 : index
      %c0_55 = arith.constant 0 : index
      %85 = vector.load %arg4[%c0_52, %c0_53, %c0_54, %c0_55] : memref<1x4x8x128xf32, #tpu.memory_space<vmem>>, vector<1x4x8x128xf32>
      tpu.vector_store %arg4[%c0_52, %c0_53, %c0_54, %c0_55], %84 {strides = array<i32>} : memref<1x4x8x128xf32, #tpu.memory_space<vmem>>, vector<1x4x8x128xf32>,
    } else {
    }
    %c0 = arith.constant 0 : index
    %c0_1 = arith.constant 0 : index
    %3 = vector.load %arg2[%c0, %c0_1] : memref<16x128xf32, #tpu.memory_space<vmem>>, vector<16x128xf32>
    %c0_2 = arith.constant 0 : index
    %c0_3 = arith.constant 0 : index
    %4 = vector.load %arg3[%c0_2, %c0_3] : memref<16x128xf32, #tpu.memory_space<vmem>>, vector<16x128xf32>
    %5 = math.absf %3 : vector<16x128xf32>
    %cst = arith.constant 0.000000e+00 : f32
    %6 = vector.broadcast %cst : f32 to vector<16x128xf32>
    %7 = arith.subf %6, %5 : vector<16x128xf32>
    %8 = math.exp %7 : vector<16x128xf32>
    %cst_4 = arith.constant 1.000000e+00 : f32
    %9 = vector.broadcast %cst_4 : f32 to vector<16x128xf32>
    %10 = arith.addf %9, %8 : vector<16x128xf32>
    %11 = math.log %10 : vector<16x128xf32>
    %cst_5 = arith.constant 1.000000e+00 : f32
    %12 = vector.broadcast %cst_5 : f32 to vector<16x128xf32>
    %13 = arith.addf %12, %8 : vector<16x128xf32>
    %14 = tpu.reciprocal %13 {approx = true} : vector<16x128xf32> -> vector<16x128xf32>
    %15 = arith.mulf %13, %14 : vector<16x128xf32>
    %cst_6 = arith.constant 2.000000e+00 : f32
    %16 = vector.broadcast %cst_6 : f32 to vector<16x128xf32>
    %17 = arith.subf %16, %15 : vector<16x128xf32>
    %18 = arith.mulf %14, %17 : vector<16x128xf32>
    %cst_7 = arith.constant 0.000000e+00 : f32
    %19 = vector.broadcast %cst_7 : f32 to vector<16x128xf32>
    %20 = arith.cmpf oge, %3, %19 : vector<16x128xf32>
    %cst_8 = arith.constant 1.000000e+00 : f32
    %21 = vector.broadcast %cst_8 : f32 to vector<16x128xf32>
    %22 = arith.select %20, %21, %8 : vector<16x128xi1>, vector<16x128xf32>
    %23 = arith.mulf %22, %18 : vector<16x128xf32>
    %cst_9 = arith.constant 0.000000e+00 : f32
    %24 = vector.broadcast %cst_9 : f32 to vector<16x128xf32>
    %25 = arith.subf %24, %3 : vector<16x128xf32>
    %cst_10 = arith.constant 0.000000e+00 : f32
    %26 = vector.broadcast %cst_10 : f32 to vector<16x128xf32>
    %27 = arith.maximumf %25, %26 : vector<16x128xf32>
    %28 = arith.addf %27, %11 : vector<16x128xf32>
    %cst_11 = arith.constant 0.000000e+00 : f32
    %29 = vector.broadcast %cst_11 : f32 to vector<16x128xf32>
    %30 = arith.subf %29, %28 : vector<16x128xf32>
    %cst_12 = arith.constant 0.000000e+00 : f32
    %31 = vector.broadcast %cst_12 : f32 to vector<16x128xf32>
    %32 = arith.maximumf %3, %31 : vector<16x128xf32>
    %33 = arith.addf %32, %11 : vector<16x128xf32>
    %cst_13 = arith.constant 0.000000e+00 : f32
    %34 = vector.broadcast %cst_13 : f32 to vector<16x128xf32>
    %35 = arith.subf %34, %33 : vector<16x128xf32>
    %cst_14 = arith.constant 1.000000e+00 : f32
    %36 = vector.broadcast %cst_14 : f32 to vector<16x128xf32>
    %37 = arith.subf %36, %23 : vector<16x128xf32>
    %38 = arith.mulf %37, %37 : vector<16x128xf32>
    %39 = arith.mulf %23, %23 : vector<16x128xf32>
    %40 = arith.mulf %4, %38 : vector<16x128xf32>
    %41 = arith.mulf %40, %30 : vector<16x128xf32>
    %cst_15 = arith.constant -2.500000e-01 : f32
    %42 = vector.broadcast %cst_15 : f32 to vector<16x128xf32>
    %43 = arith.mulf %42, %41 : vector<16x128xf32>
    %cst_16 = arith.constant 1.000000e+00 : f32
    %44 = vector.broadcast %cst_16 : f32 to vector<16x128xf32>
    %45 = arith.subf %44, %4 : vector<16x128xf32>
    %46 = arith.mulf %45, %39 : vector<16x128xf32>
    %47 = arith.mulf %46, %35 : vector<16x128xf32>
    %cst_17 = arith.constant 7.500000e-01 : f32
    %48 = vector.broadcast %cst_17 : f32 to vector<16x128xf32>
    %49 = arith.mulf %48, %47 : vector<16x128xf32>
    %50 = arith.subf %43, %49 : vector<16x128xf32>
    %c0_18 = arith.constant 0 : index
    %c0_19 = arith.constant 0 : index
    %c0_20 = arith.constant 0 : index
    %c0_21 = arith.constant 0 : index
    %51 = vector.load %arg4[%c0_18, %c0_19, %c0_20, %c0_21] : memref<1x4x8x128xf32, #tpu.memory_space<vmem>>, vector<1x1x8x128xf32>
    %52 = vector.shape_cast %51 : vector<1x1x8x128xf32> to vector<8x128xf32>
    %53 = arith.mulf %23, %4 : vector<16x128xf32>
    %54 = vector.shape_cast %53 : vector<16x128xf32> to vector<2x8x128xf32>
    %cst_22 = arith.constant dense<0.000000e+00> : vector<8x128xf32>
    %55 = vector.multi_reduction <add>, %54, %cst_22 [0] : vector<2x8x128xf32> to vector<8x128xf32>
    %56 = arith.addf %52, %55 : vector<8x128xf32>
    %c0_23 = arith.constant 0 : index
    %c0_24 = arith.constant 0 : index
    %c0_25 = arith.constant 0 : index
    %c0_26 = arith.constant 0 : index
    %57 = vector.load %arg4[%c0_23, %c0_24, %c0_25, %c0_26] : memref<1x4x8x128xf32, #tpu.memory_space<vmem>>, vector<1x1x8x128xf32>
    %58 = vector.shape_cast %57 : vector<1x1x8x128xf32> to vector<8x128xf32>
    %59 = vector.shape_cast %56 : vector<8x128xf32> to vector<1x1x8x128xf32>
    tpu.vector_store %arg4[%c0_23, %c0_24, %c0_25, %c0_26], %59 {strides = array<i32>} : memref<1x4x8x128xf32, #tpu.memory_space<vmem>>, vector<1x1x8x128xf32>,
    %c0_27 = arith.constant 0 : index
    %c1 = arith.constant 1 : index
    %c0_28 = arith.constant 0 : index
    %c0_29 = arith.constant 0 : index
    %60 = vector.load %arg4[%c0_27, %c1, %c0_28, %c0_29] : memref<1x4x8x128xf32, #tpu.memory_space<vmem>>, vector<1x1x8x128xf32>
    %61 = vector.shape_cast %60 : vector<1x1x8x128xf32> to vector<8x128xf32>
    %62 = vector.shape_cast %23 : vector<16x128xf32> to vector<2x8x128xf32>
    %cst_30 = arith.constant dense<0.000000e+00> : vector<8x128xf32>
    %63 = vector.multi_reduction <add>, %62, %cst_30 [0] : vector<2x8x128xf32> to vector<8x128xf32>
    %64 = arith.addf %61, %63 : vector<8x128xf32>
    %c0_31 = arith.constant 0 : index
    %c1_32 = arith.constant 1 : index
    %c0_33 = arith.constant 0 : index
    %c0_34 = arith.constant 0 : index
    %65 = vector.load %arg4[%c0_31, %c1_32, %c0_33, %c0_34] : memref<1x4x8x128xf32, #tpu.memory_space<vmem>>, vector<1x1x8x128xf32>
    %66 = vector.shape_cast %65 : vector<1x1x8x128xf32> to vector<8x128xf32>
    %67 = vector.shape_cast %64 : vector<8x128xf32> to vector<1x1x8x128xf32>
    tpu.vector_store %arg4[%c0_31, %c1_32, %c0_33, %c0_34], %67 {strides = array<i32>} : memref<1x4x8x128xf32, #tpu.memory_space<vmem>>, vector<1x1x8x128xf32>,
    %c0_35 = arith.constant 0 : index
    %c2 = arith.constant 2 : index
    %c0_36 = arith.constant 0 : index
    %c0_37 = arith.constant 0 : index
    %68 = vector.load %arg4[%c0_35, %c2, %c0_36, %c0_37] : memref<1x4x8x128xf32, #tpu.memory_space<vmem>>, vector<1x1x8x128xf32>
    %69 = vector.shape_cast %68 : vector<1x1x8x128xf32> to vector<8x128xf32>
    %70 = vector.shape_cast %4 : vector<16x128xf32> to vector<2x8x128xf32>
    %cst_38 = arith.constant dense<0.000000e+00> : vector<8x128xf32>
    %71 = vector.multi_reduction <add>, %70, %cst_38 [0] : vector<2x8x128xf32> to vector<8x128xf32>
    %72 = arith.addf %69, %71 : vector<8x128xf32>
    %c0_39 = arith.constant 0 : index
    %c2_40 = arith.constant 2 : index
    %c0_41 = arith.constant 0 : index
    %c0_42 = arith.constant 0 : index
    %73 = vector.load %arg4[%c0_39, %c2_40, %c0_41, %c0_42] : memref<1x4x8x128xf32, #tpu.memory_space<vmem>>, vector<1x1x8x128xf32>
    %74 = vector.shape_cast %73 : vector<1x1x8x128xf32> to vector<8x128xf32>
    %75 = vector.shape_cast %72 : vector<8x128xf32> to vector<1x1x8x128xf32>
    tpu.vector_store %arg4[%c0_39, %c2_40, %c0_41, %c0_42], %75 {strides = array<i32>} : memref<1x4x8x128xf32, #tpu.memory_space<vmem>>, vector<1x1x8x128xf32>,
    %c0_43 = arith.constant 0 : index
    %c3 = arith.constant 3 : index
    %c0_44 = arith.constant 0 : index
    %c0_45 = arith.constant 0 : index
    %76 = vector.load %arg4[%c0_43, %c3, %c0_44, %c0_45] : memref<1x4x8x128xf32, #tpu.memory_space<vmem>>, vector<1x1x8x128xf32>
    %77 = vector.shape_cast %76 : vector<1x1x8x128xf32> to vector<8x128xf32>
    %78 = vector.shape_cast %50 : vector<16x128xf32> to vector<2x8x128xf32>
    %cst_46 = arith.constant dense<0.000000e+00> : vector<8x128xf32>
    %79 = vector.multi_reduction <add>, %78, %cst_46 [0] : vector<2x8x128xf32> to vector<8x128xf32>
    %80 = arith.addf %77, %79 : vector<8x128xf32>
    %c0_47 = arith.constant 0 : index
    %c3_48 = arith.constant 3 : index
    %c0_49 = arith.constant 0 : index
    %c0_50 = arith.constant 0 : index
    %81 = vector.load %arg4[%c0_47, %c3_48, %c0_49, %c0_50] : memref<1x4x8x128xf32, #tpu.memory_space<vmem>>, vector<1x1x8x128xf32>
    %82 = vector.shape_cast %81 : vector<1x1x8x128xf32> to vector<8x128xf32>
    %83 = vector.shape_cast %80 : vector<8x128xf32> to vector<1x1x8x128xf32>
    tpu.vector_store %arg4[%c0_47, %c3_48, %c0_49, %c0_50], %83 {strides = array<i32>} : memref<1x4x8x128xf32, #tpu.memory_space<vmem>>, vector<1x1x8x128xf32>,
    return
  }
  func.func @transform_0(%arg0: i32, %arg1: i32) -> (i32, i32) {
    %c1_i32 = arith.constant 1 : i32
    %0 = arith.muli %arg0, %c1_i32 : i32
    %1 = arith.addi %0, %arg1 : i32
    %c0_i32 = arith.constant 0 : i32
    %2 = arith.minsi %1, %c0_i32 : i32
    %c0_i32_0 = arith.constant 0 : i32
    %c0_i32_1 = arith.constant 0 : i32
    return %2, %c0_i32_0 : i32, i32
  }
  func.func @transform_1(%arg0: i32, %arg1: i32) -> (i32, i32) {
    %c1_i32 = arith.constant 1 : i32
    %0 = arith.muli %arg0, %c1_i32 : i32
    %1 = arith.addi %0, %arg1 : i32
    %c0_i32 = arith.constant 0 : i32
    %2 = arith.minsi %1, %c0_i32 : i32
    %c0_i32_0 = arith.constant 0 : i32
    %c0_i32_1 = arith.constant 0 : i32
    return %2, %c0_i32_0 : i32, i32
  }
  func.func @transform_2(%arg0: i32, %arg1: i32) -> (i32, i32, i32, i32) {
    %c0_i32 = arith.constant 0 : i32
    %c0_i32_0 = arith.constant 0 : i32
    %c0_i32_1 = arith.constant 0 : i32
    %c0_i32_2 = arith.constant 0 : i32
    return %arg0, %c0_i32, %c0_i32_0, %c0_i32_1 : i32, i32, i32, i32
  }
}

</mosaic_0001>

<llo_original>
// kernel: tpu_custom_call.1
$region0: #{tpu_custom_call.1}
  #allocation0 [shape = 'u32[]', space=smem, size = 0x4, offset = 0x4, fixed_abs, tag = 'smem constant byte address 0x4 - core index']
  #allocation1 [shape = 'u32[72,128]{1,0:T(1,128)}', space=vmem, size = 0x9000, scoped, tag = 'internal scratch']
  %s0 = inlined_call_operand.hbm [shape: f32[16,128], index: 0, kind: input, shape index: {}]
  %s1 = inlined_call_operand.hbm [shape: f32[16,128], index: 1, kind: input, shape index: {}]
  %s2 = inlined_call_operand.hbm [shape: f32[1,4,8,128], index: 2, kind: output, shape index: {}]
  %s3 = sld [smem:[#allocation0]]
  $region30: #{tpu_custom_call.1} parent=0
    _
  %s5 = ssub.s32 1, %s3
  %s6 = scalar_select 0, %s5, %s3
  $region1: #{tpu_custom_call.1} parent=0
    #allocation2 [shape = 'u8[8192]{0}', space=vmem, size = 0x2000, scoped, tag = 'input window, operand 0, single buffered']
    #allocation3 [shape = 's32[1]{0}', space=sflag, size = 0x4, scoped, tag = 'scoped memory for tpu_custom_call.1']
    #allocation4 [shape = 's32[1]{0}', space=sflag, size = 0x4, scoped, tag = 'scoped memory for tpu_custom_call.1']
    #allocation5 [shape = 'u8[8192]{0}', space=vmem, size = 0x2000, scoped, tag = 'input window, operand 1, single buffered']
    #allocation6 [shape = 's32[1]{0}', space=sflag, size = 0x4, scoped, tag = 'scoped memory for tpu_custom_call.1']
    #allocation7 [shape = 'u8[16384]{0}', space=vmem, size = 0x4000, scoped, tag = 'output window, operand 0, single buffered']
    %7 = vsyncpa [#allocation3], 0
    %8 = vsyncpa [#allocation6], 0
    %9 = vsyncpa [#allocation4], 0
    // Predicated region
    $region2: #{tpu_custom_call.1} parent=1 // pred_check
      _
    $region3: #{tpu_custom_call.1} parent=1 // pred_check_branch
      %11 = sbr.rel (0) target = $region5
    $region4: #{tpu_custom_call.1} parent=1 // pred_region
      %s12 = sadd.s32 0, 0
      %p13 = scmp.lt.s32.totalorder %s12, 0
      %s14 = scalar_select %p13, %s12, 0
      %s15 = smul.u32 2, %s14
      %17 = vsyncadd [#allocation3], 0
      %s18 = smul.addr %s15, 8
      %s19 = scalar_lea.hbm %s0, %s18
      %s20 = sshll.u32 %s19, 4
      %s21 = int_to_ptr.hbm [resolvable:$true] %s20
      %s22 = sshll.u32 [#allocation2], 4
      %s23 = int_to_ptr.vmem [resolvable:$true] %s22
      %28 = dma.hbm_to_vmem [thread:$0]  %s21, 256, %s23, [#allocation3], 128, 128, 8
    $region5: #{tpu_custom_call.1} parent=1 // pred_fallthru
      _
    // Predicated region
    $region6: #{tpu_custom_call.1} parent=1 // pred_check
      _
    $region7: #{tpu_custom_call.1} parent=1 // pred_check_branch
      %30 = sbr.rel (0) target = $region9
    $region8: #{tpu_custom_call.1} parent=1 // pred_region
      %s31 = sadd.s32 0, 0
      %p32 = scmp.lt.s32.totalorder %s31, 0
      %s33 = scalar_select %p32, %s31, 0
      %s34 = smul.u32 2, %s33
      %36 = vsyncadd [#allocation6], 0
      %s37 = smul.addr %s34, 8
      %s38 = scalar_lea.hbm %s1, %s37
      %s39 = sshll.u32 %s38, 4
      %s40 = int_to_ptr.hbm [resolvable:$true] %s39
      %s41 = sshll.u32 [#allocation5], 4
      %s42 = int_to_ptr.vmem [resolvable:$true] %s41
      %47 = dma.hbm_to_vmem [thread:$0]  %s40, 256, %s42, [#allocation6], 128, 128, 8
    $region9: #{tpu_custom_call.1} parent=1 // pred_fallthru
      _
    // Predicated region
    $region10: #{tpu_custom_call.1} parent=1 // pred_check
      _
    $region11: #{tpu_custom_call.1} parent=1 // pred_check_branch
      %49 = sbr.rel (0) target = $region13
    $region12: #{tpu_custom_call.1} parent=1 // pred_region
      %51 = dma.done [#allocation3], 256
    $region13: #{tpu_custom_call.1} parent=1 // pred_fallthru
      _
    // Predicated region
    $region14: #{tpu_custom_call.1} parent=1 // pred_check
      _
    $region15: #{tpu_custom_call.1} parent=1 // pred_check_branch
      %53 = sbr.rel (0) target = $region17
    $region16: #{tpu_custom_call.1} parent=1 // pred_region
      %55 = dma.done [#allocation6], 256
    $region17: #{tpu_custom_call.1} parent=1 // pred_fallthru
      _
    %s56 = sadd.s32 0, 0
    %p57 = scmp.lt.s32.totalorder %s56, 0
    %s58 = scalar_select %p57, %s56, 0
    %s59 = smul.u32 2, %s58
    %s60 = sadd.s32 0, 0
    %p61 = scmp.lt.s32.totalorder %s60, 0
    %s62 = scalar_select %p61, %s60, 0
    %s63 = smul.u32 2, %s62
    %p64 = scmp.eq.s32.totalorder 0, 0
    // Predicated region
    $region18: #{tpu_custom_call.1} parent=1 // pred_check
      %p65 = pneg %p64
    $region19: #{tpu_custom_call.1} parent=1 // pred_check_branch
      %67 = sbr.rel (%p65) target = $region21
    $region20: #{tpu_custom_call.1} parent=1 // pred_region
      %68 = vst [vmem:[#allocation7] sm:$0xff] 0.0
      %69 = vst [vmem:[#allocation7 + $0x8] sm:$0xff] 0.0
      %70 = vst [vmem:[#allocation7 + $0x10] sm:$0xff] 0.0
      %71 = vst [vmem:[#allocation7 + $0x18] sm:$0xff] 0.0
    $region21: #{tpu_custom_call.1} parent=1 // pred_fallthru
      _
    %v72 = vld [vmem:[#allocation2] sm:$0xff]
    %v73 = vld [vmem:[#allocation2 + $0x8] sm:$0xff]
    %v74 = vld [vmem:[#allocation5] sm:$0xff]
    %v75 = vld [vmem:[#allocation5 + $0x8] sm:$0xff]
    %v76 = vand.u32 2147483647, %v72
    %v77 = vand.u32 2147483647, %v73
    %v78 = vsub.f32 0.0, %v76
    %v79 = vsub.f32 0.0, %v77
    %v80 = vmul.f32 %v78, 1.442695
    %v81 = vpow.pop %v80
    %v82 = vmul.f32 %v79, 1.442695
    %v83 = vpow.pop %v82
    %v84 = vadd.f32 %v81, 1.0
    %v85 = vadd.f32 %v83, 1.0
    %v86 = vlog2.pop %v84
    %v87 = vmul.f32 %v86, 0.6931472
    %v88 = vlog2.pop %v85
    %v89 = vmul.f32 %v88, 0.6931472
    %v90 = vrcp.pop %v84
    %v91 = vrcp.pop %v85
    %v92 = vmul.f32 %v84, %v90
    %v93 = vmul.f32 %v85, %v91
    %v94 = vsub.f32 2.0, %v92
    %v95 = vsub.f32 2.0, %v93
    %v96 = vmul.f32 %v90, %v94
    %v97 = vmul.f32 %v91, %v95
    %vm98 = vcmp.ge.f32.partialorder %v72, 0.0
    %vm99 = vcmp.ge.f32.partialorder %v73, 0.0
    %v100 = vsel %vm98, 1.0, %v81
    %v101 = vsel %vm99, 1.0, %v83
    %v102 = vmul.f32 %v100, %v96
    %v103 = vmul.f32 %v101, %v97
    %v104 = vsub.f32 0.0, %v72
    %v105 = vsub.f32 0.0, %v73
    %v106 = vmax.f32 %v104, 0.0
    %v107 = vmax.f32 %v105, 0.0
    %v108 = vadd.f32 %v106, %v87
    %v109 = vadd.f32 %v107, %v89
    %v110 = vsub.f32 0.0, %v108
    %v111 = vsub.f32 0.0, %v109
    %v112 = vmax.f32 %v72, 0.0
    %v113 = vmax.f32 %v73, 0.0
    %v114 = vadd.f32 %v112, %v87
    %v115 = vadd.f32 %v113, %v89
    %v116 = vsub.f32 0.0, %v114
    %v117 = vsub.f32 0.0, %v115
    %v118 = vsub.f32 1.0, %v102
    %v119 = vsub.f32 1.0, %v103
    %v120 = vmul.f32 %v118, %v118
    %v121 = vmul.f32 %v119, %v119
    %v122 = vmul.f32 %v102, %v102
    %v123 = vmul.f32 %v103, %v103
    %v124 = vmul.f32 %v74, %v120
    %v125 = vmul.f32 %v75, %v121
    %v126 = vmul.f32 %v124, %v110
    %v127 = vmul.f32 %v125, %v111
    %v128 = vmul.f32 %v126, -0.25
    %v129 = vmul.f32 %v127, -0.25
    %v130 = vsub.f32 1.0, %v74
    %v131 = vsub.f32 1.0, %v75
    %v132 = vmul.f32 %v130, %v122
    %v133 = vmul.f32 %v131, %v123
    %v134 = vmul.f32 %v132, %v116
    %v135 = vmul.f32 %v133, %v117
    %v136 = vmul.f32 %v134, 0.75
    %v137 = vmul.f32 %v135, 0.75
    %v138 = vsub.f32 %v128, %v136
    %v139 = vsub.f32 %v129, %v137
    %v140 = vld [vmem:[#allocation7] sm:$0xff]
    %v141 = vmul.f32 %v102, %v74
    %v142 = vmul.f32 %v103, %v75
    %v143 = vadd.f32 %v141, %v142
    %v144 = vadd.f32 %v140, %v143
    %145 = vst [vmem:[#allocation7] sm:$0xff] %v144
    %s146 = scalar_lea.vmem [#allocation7], 8
    %v147 = vld [vmem:[%s146] sm:$0xff]
    %v148 = vadd.f32 %v102, %v103
    %v149 = vadd.f32 %v147, %v148
    %150 = vst [vmem:[%s146] sm:$0xff] %v149
    %s151 = scalar_lea.vmem [#allocation7], 16
    %v152 = vld [vmem:[%s151] sm:$0xff]
    %v153 = vadd.f32 %v74, %v75
    %v154 = vadd.f32 %v152, %v153
    %155 = vst [vmem:[%s151] sm:$0xff] %v154
    %s156 = scalar_lea.vmem [#allocation7], 24
    %v157 = vld [vmem:[%s156] sm:$0xff]
    %v158 = vadd.f32 %v138, %v139
    %v159 = vadd.f32 %v157, %v158
    %160 = vst [vmem:[%s156] sm:$0xff] %v159
    // Predicated region
    $region22: #{tpu_custom_call.1} parent=1 // pred_check
      _
    $region23: #{tpu_custom_call.1} parent=1 // pred_check_branch
      %162 = sbr.rel (0) target = $region25
    $region24: #{tpu_custom_call.1} parent=1 // pred_region
      %164 = vsyncadd [#allocation4], 0
      %s165 = sshll.u32 [#allocation7], 4
      %s166 = int_to_ptr.vmem [resolvable:$true] %s165
      %s167 = sshll.u32 %s2, 4
      %s168 = int_to_ptr.hbm [resolvable:$true] %s167
      %173 = dma.vmem_to_hbm [thread:$0]  %s166, 512, %s168, [#allocation4], 128, 128, 8
    $region25: #{tpu_custom_call.1} parent=1 // pred_fallthru
      _
    // Predicated region
    $region26: #{tpu_custom_call.1} parent=1 // pred_check
      _
    $region27: #{tpu_custom_call.1} parent=1 // pred_check_branch
      %175 = sbr.rel (0) target = $region29
    $region28: #{tpu_custom_call.1} parent=1 // pred_region
      %177 = dma.done [#allocation4], 512
    $region29: #{tpu_custom_call.1} parent=1 // pred_fallthru
      _
    %178 = vsyncpa [#allocation3], 1
    %179 = vsyncpa [#allocation6], 1
    %180 = vsyncpa [#allocation4], 1

</llo_original>
